<compile_context>
chip_gen: v6e
topology: v6e:2x2x1
jax: 0.10.0
libtpu: 0.0.40
codegen_flags: <defaults>
</compile_context>

<pallas_src>
import jax
import jax.numpy as jnp
from jax.experimental import pallas as pl
from jax.experimental.pallas import tpu as pltpu

IN_FEATURES = 576
OUT_FEATURES = 120
TILE_B_MAX = 4096                      # ~23 MiB double-buffered x/out at 4096
VMEM_LIMIT_BYTES = 48 * 1024 * 1024    # raise scoped-VMEM default (safe on all gens)


def _round_up(n, m):
    return ((n + m - 1) // m) * m


def _linear_kernel(x_ref, w_ref, b_ref, o_ref):
    # x: (tile_b, 576)  w: (576, 120)  b: (1, 120)  o: (tile_b, 120)
    acc = jnp.dot(x_ref[...], w_ref[...], preferred_element_type=jnp.float32)
    o_ref[...] = (acc + b_ref[...]).astype(o_ref.dtype)


def prepare_params(weight, bias):
    """One-time prep (outside the hot path): weight -> [576, 120], bias -> [1, 120]."""
    return weight.T, bias.reshape(1, OUT_FEATURES)


@jax.jit
def net_forward(x, w_t, b_row):
    """x: [B, 576] f32, w_t: [576, 120], b_row: [1, 120] -> y: [B, 120]."""
    B = x.shape[0]

    # Batch tile: multiple of 8 (f32 sublane), capped at TILE_B_MAX, and sized so
    # the grid has >= 2 steps when B allows it (lets v7x's two TensorCores split
    # the "parallel" batch axis; harmless on single-core v5e/v6e).
    tile_b = min(TILE_B_MAX, _round_up(max(pl.cdiv(B, 2), 1), 8))
    grid = (pl.cdiv(B, tile_b),)   # ragged last block handled by Pallas (no jnp.pad)

    return pl.pallas_call(
        _linear_kernel,
        out_shape=jax.ShapeDtypeStruct((B, OUT_FEATURES), x.dtype),
        grid_spec=pltpu.PrefetchScalarGridSpec(
            num_scalar_prefetch=0,
            grid=grid,
            in_specs=[
                # x tile marches over the batch axis (pipelined by Pallas).
                pl.BlockSpec((tile_b, IN_FEATURES), lambda i: (i, 0)),
                # Weight / bias stay VMEM-resident: constant block index,
                # single buffer (never re-fetched).
                pl.BlockSpec((IN_FEATURES, OUT_FEATURES), lambda i: (0, 0),
                             pipeline_mode=pl.Buffered(1)),
                pl.BlockSpec((1, OUT_FEATURES), lambda i: (0, 0),
                             pipeline_mode=pl.Buffered(1)),
            ],
            # 120-wide output written directly from the kernel (masked stores);
            # no separate XLA slice pass afterwards.
            out_specs=pl.BlockSpec((tile_b, OUT_FEATURES), lambda i: (i, 0)),
        ),
        compiler_params=pltpu.CompilerParams(
            dimension_semantics=("parallel",),
            vmem_limit_bytes=VMEM_LIMIT_BYTES),
    )(x, w_t, b_row)


if __name__ == "__main__":
    key = jax.random.PRNGKey(0)
    kx, kw, kb = jax.random.split(key, 3)

    batch = 8
    x = jax.random.normal(kx, (batch, IN_FEATURES), dtype=jnp.float32)

    # Deterministic parameter init (mimics PyTorch nn.Linear uniform bound).
    bound = 1.0 / (IN_FEATURES ** 0.5)
    weight = jax.random.uniform(
        kw, (OUT_FEATURES, IN_FEATURES), minval=-bound, maxval=bound,
        dtype=jnp.float32)
    bias = jax.random.uniform(
        kb, (OUT_FEATURES,), minval=-bound, maxval=bound, dtype=jnp.float32)

    # One-time parameter prep (outside the hot path).
    w_t, b_row = prepare_params(weight, bias)
    w_t, b_row = jax.block_until_ready((w_t, b_row))

    y = net_forward(x, w_t, b_row)
    jax.block_until_ready(y)

    # Correctness check against plain JAX reference (f32 throughout).
    y_ref = x @ weight.T + bias
    assert y.shape == (batch, OUT_FEATURES)
    assert jnp.allclose(y, y_ref, atol=1e-4, rtol=1e-4)

    # Also exercise the ragged-last-block path (B not a multiple of the tile).
    batch2 = 11
    x2 = jax.random.normal(kx, (batch2, IN_FEATURES), dtype=jnp.float32)
    y2 = jax.block_until_ready(net_forward(x2, w_t, b_row))
    assert y2.shape == (batch2, OUT_FEATURES)
    assert jnp.allclose(y2, x2 @ weight.T + bias, atol=1e-4, rtol=1e-4)

    print("KERNEL_OK")
</pallas_src>

<mosaic_0001>
module attributes {stable_mosaic.version = 11 : i64} {
  func.func @_linear_kernel(%arg0: i32, %arg1: memref<8x576xf32, #tpu.memory_space<vmem>>, %arg2: memref<576x120xf32, #tpu.memory_space<vmem>>, %arg3: memref<1x120xf32, #tpu.memory_space<vmem>>, %arg4: memref<8x120xf32, #tpu.memory_space<vmem>>) attributes {dimension_semantics = [#tpu.dimension_semantics<parallel>], iteration_bounds = array<i64: 1>, scalar_prefetch = 0 : i64, scratch_operands = 0 : i64, tpu.core_type = #tpu.core_type<tc>, window_params = [{transform_indices = @transform_0, window_bounds = array<i64: 8, 576>}, {pipeline_mode = #tpu.pipeline_mode<synchronous>, transform_indices = @transform_1, window_bounds = array<i64: 576, 120>}, {pipeline_mode = #tpu.pipeline_mode<synchronous>, transform_indices = @transform_2, window_bounds = array<i64: 1, 120>}, {transform_indices = @transform_3, window_bounds = array<i64: 8, 120>}]} {
    %c0 = arith.constant 0 : index
    %c0_0 = arith.constant 0 : index
    %0 = vector.load %arg1[%c0, %c0_0] : memref<8x576xf32, #tpu.memory_space<vmem>>, vector<8x576xf32>
    %c0_1 = arith.constant 0 : index
    %c0_2 = arith.constant 0 : index
    %1 = vector.load %arg2[%c0_1, %c0_2] : memref<576x120xf32, #tpu.memory_space<vmem>>, vector<576x120xf32>
    %cst = arith.constant dense<0.000000e+00> : vector<8x120xf32>
    %2 = tpu.matmul %0, %1, %cst {dimension_numbers = #tpu.dot_dimension_numbers<[1], [0], [0], [1], [0, 0, 1, 1], [], []>} : vector<8x576xf32>, vector<576x120xf32>, vector<8x120xf32> -> vector<8x120xf32>
    %c0_3 = arith.constant 0 : index
    %c0_4 = arith.constant 0 : index
    %3 = vector.load %arg3[%c0_3, %c0_4] : memref<1x120xf32, #tpu.memory_space<vmem>>, vector<1x120xf32>
    %4 = vector.broadcast %3 : vector<1x120xf32> to vector<8x120xf32>
    %5 = arith.addf %2, %4 : vector<8x120xf32>
    %c0_5 = arith.constant 0 : index
    %c0_6 = arith.constant 0 : index
    %6 = vector.load %arg4[%c0_5, %c0_6] : memref<8x120xf32, #tpu.memory_space<vmem>>, vector<8x120xf32>
    tpu.vector_store %arg4[%c0_5, %c0_6], %5 {strides = array<i32>} : memref<8x120xf32, #tpu.memory_space<vmem>>, vector<8x120xf32>,
    return
  }
  func.func @transform_0(%arg0: i32) -> (i32, i32) {
    %c0_i32 = arith.constant 0 : i32
    %c0_i32_0 = arith.constant 0 : i32
    return %arg0, %c0_i32 : i32, i32
  }
  func.func @transform_1(%arg0: i32) -> (i32, i32) {
    %c0_i32 = arith.constant 0 : i32
    %c0_i32_0 = arith.constant 0 : i32
    %c0_i32_1 = arith.constant 0 : i32
    return %c0_i32, %c0_i32_0 : i32, i32
  }
  func.func @transform_2(%arg0: i32) -> (i32, i32) {
    %c0_i32 = arith.constant 0 : i32
    %c0_i32_0 = arith.constant 0 : i32
    %c0_i32_1 = arith.constant 0 : i32
    return %c0_i32, %c0_i32_0 : i32, i32
  }
  func.func @transform_3(%arg0: i32) -> (i32, i32) {
    %c0_i32 = arith.constant 0 : i32
    %c0_i32_0 = arith.constant 0 : i32
    return %arg0, %c0_i32 : i32, i32
  }
}

</mosaic_0001>

<llo_original>
// kernel: net_forward.1
$region0: #{net_forward.1}
  #allocation0 [shape = 'u32[]', space=smem, size = 0x4, offset = 0x4, fixed_abs, tag = 'smem constant byte address 0x4 - core index']
  #allocation1 [shape = 'u32[144,128]{1,0:T(1,128)}', space=vmem, size = 0x12000, scoped, tag = 'internal scratch']
  %s0 = inlined_call_operand.hbm [shape: f32[8,576], index: 0, kind: input, shape index: {}]
  %s1 = inlined_call_operand.hbm [shape: f32[576,120], index: 1, kind: input, shape index: {}]
  %s2 = inlined_call_operand.vmem [shape: f32[1,120], index: 2, kind: input, shape index: {}]
  %s3 = inlined_call_operand.hbm [shape: f32[8,120], index: 3, kind: output, shape index: {}]
  %s4 = sld [smem:[#allocation0]]
  $region30: #{net_forward.1} parent=0
    _
  %s6 = ssub.s32 1, %s4
  %s7 = scalar_select 0, %s6, %s4
  $region1: #{net_forward.1} parent=0
    #allocation2 [shape = 'u8[20480]{0}', space=vmem, size = 0x5000, scoped, tag = 'input window, operand 0, single buffered']
    #allocation3 [shape = 's32[1]{0}', space=sflag, size = 0x4, scoped, tag = 'scoped memory for net_forward.1']
    #allocation4 [shape = 's32[1]{0}', space=sflag, size = 0x4, scoped, tag = 'scoped memory for net_forward.1']
    #allocation5 [shape = 'u8[294912]{0}', space=vmem, size = 0x48000, scoped, tag = 'input window, operand 1, single buffered']
    #allocation6 [shape = 's32[1]{0}', space=sflag, size = 0x4, scoped, tag = 'scoped memory for net_forward.1']
    #allocation7 [shape = 'u8[4096]{0}', space=vmem, size = 0x1000, scoped, tag = 'output window, operand 0, single buffered']
    %8 = vsyncpa [#allocation3], 0
    %9 = vsyncpa [#allocation6], 0
    %10 = vsyncpa [#allocation4], 0
    // Predicated region
    $region2: #{net_forward.1} parent=1 // pred_check
      _
    $region3: #{net_forward.1} parent=1 // pred_check_branch
      %12 = sbr.rel (0) target = $region5
    $region4: #{net_forward.1} parent=1 // pred_region
      %s14 = ssub.s32 640, 640
      %15 = vsyncadd [#allocation3], %s14
      %s17 = sshll.u32 [#allocation2], 4
      %s18 = int_to_ptr.vmem [resolvable:$true] %s17
      %20 = dma.hbm_to_vmem [thread:$0]  %s0, 640, %s18, [#allocation3]
    $region5: #{net_forward.1} parent=1 // pred_fallthru
      _
    // Predicated region
    $region6: #{net_forward.1} parent=1 // pred_check
      _
    $region7: #{net_forward.1} parent=1 // pred_check_branch
      %22 = sbr.rel (0) target = $region9
    $region8: #{net_forward.1} parent=1 // pred_region
      %s24 = ssub.s32 9216, 9216
      %25 = vsyncadd [#allocation6], %s24
      %s26 = sshll.u32 [#allocation5], 4
      %s27 = int_to_ptr.vmem [resolvable:$true] %s26
      %32 = dma.hbm_to_vmem [thread:$0]  %s1, 9216, %s27, [#allocation6], 128, 128, 8
    $region9: #{net_forward.1} parent=1 // pred_fallthru
      _
    // Predicated region
    $region10: #{net_forward.1} parent=1 // pred_check
      _
    $region11: #{net_forward.1} parent=1 // pred_check_branch
      %34 = sbr.rel (0) target = $region13
    $region12: #{net_forward.1} parent=1 // pred_region
      _
    $region13: #{net_forward.1} parent=1 // pred_fallthru
      _
    // Predicated region
    $region14: #{net_forward.1} parent=1 // pred_check
      _
    $region15: #{net_forward.1} parent=1 // pred_check_branch
      %36 = sbr.rel (0) target = $region17
    $region16: #{net_forward.1} parent=1 // pred_region
      %37 = dma.done [#allocation3], 640
    $region17: #{net_forward.1} parent=1 // pred_fallthru
      _
    // Predicated region
    $region18: #{net_forward.1} parent=1 // pred_check
      _
    $region19: #{net_forward.1} parent=1 // pred_check_branch
      %39 = sbr.rel (0) target = $region21
    $region20: #{net_forward.1} parent=1 // pred_region
      %40 = dma.done [#allocation6], 9216
    $region21: #{net_forward.1} parent=1 // pred_fallthru
      _
    %v41 = vld [vmem:[#allocation2] sm:$0xff]
    %v42 = vld [vmem:[#allocation2 + $0x8] sm:$0xff]
    %v43 = vld [vmem:[#allocation2 + $0x10] sm:$0xff]
    %v44 = vld [vmem:[#allocation2 + $0x18] sm:$0xff]
    %v45 = vld [vmem:[#allocation2 + $0x20] sm:$0xff]
    %v46 = vld [vmem:[#allocation5] sm:$0xff]
    %v47 = vld [vmem:[#allocation5 + $0x8] sm:$0xff]
    %v48 = vld [vmem:[#allocation5 + $0x10] sm:$0xff]
    %v49 = vld [vmem:[#allocation5 + $0x18] sm:$0xff]
    %v50 = vld [vmem:[#allocation5 + $0x20] sm:$0xff]
    %v51 = vld [vmem:[#allocation5 + $0x28] sm:$0xff]
    %v52 = vld [vmem:[#allocation5 + $0x30] sm:$0xff]
    %v53 = vld [vmem:[#allocation5 + $0x38] sm:$0xff]
    %v54 = vld [vmem:[#allocation5 + $0x40] sm:$0xff]
    %v55 = vld [vmem:[#allocation5 + $0x48] sm:$0xff]
    %v56 = vld [vmem:[#allocation5 + $0x50] sm:$0xff]
    %v57 = vld [vmem:[#allocation5 + $0x58] sm:$0xff]
    %v58 = vld [vmem:[#allocation5 + $0x60] sm:$0xff]
    %v59 = vld [vmem:[#allocation5 + $0x68] sm:$0xff]
    %v60 = vld [vmem:[#allocation5 + $0x70] sm:$0xff]
    %v61 = vld [vmem:[#allocation5 + $0x78] sm:$0xff]
    %v62 = vld [vmem:[#allocation5 + $0x80] sm:$0xff]
    %v63 = vld [vmem:[#allocation5 + $0x88] sm:$0xff]
    %v64 = vld [vmem:[#allocation5 + $0x90] sm:$0xff]
    %v65 = vld [vmem:[#allocation5 + $0x98] sm:$0xff]
    %v66 = vld [vmem:[#allocation5 + $0xa0] sm:$0xff]
    %v67 = vld [vmem:[#allocation5 + $0xa8] sm:$0xff]
    %v68 = vld [vmem:[#allocation5 + $0xb0] sm:$0xff]
    %v69 = vld [vmem:[#allocation5 + $0xb8] sm:$0xff]
    %v70 = vld [vmem:[#allocation5 + $0xc0] sm:$0xff]
    %v71 = vld [vmem:[#allocation5 + $0xc8] sm:$0xff]
    %v72 = vld [vmem:[#allocation5 + $0xd0] sm:$0xff]
    %v73 = vld [vmem:[#allocation5 + $0xd8] sm:$0xff]
    %v74 = vld [vmem:[#allocation5 + $0xe0] sm:$0xff]
    %v75 = vld [vmem:[#allocation5 + $0xe8] sm:$0xff]
    %v76 = vld [vmem:[#allocation5 + $0xf0] sm:$0xff]
    %v77 = vld [vmem:[#allocation5 + $0xf8] sm:$0xff]
    %v78 = vld [vmem:[#allocation5 + $0x100] sm:$0xff]
    %v79 = vld [vmem:[#allocation5 + $0x108] sm:$0xff]
    %v80 = vld [vmem:[#allocation5 + $0x110] sm:$0xff]
    %v81 = vld [vmem:[#allocation5 + $0x118] sm:$0xff]
    %v82 = vld [vmem:[#allocation5 + $0x120] sm:$0xff]
    %v83 = vld [vmem:[#allocation5 + $0x128] sm:$0xff]
    %v84 = vld [vmem:[#allocation5 + $0x130] sm:$0xff]
    %v85 = vld [vmem:[#allocation5 + $0x138] sm:$0xff]
    %v86 = vld [vmem:[#allocation5 + $0x140] sm:$0xff]
    %v87 = vld [vmem:[#allocation5 + $0x148] sm:$0xff]
    %v88 = vld [vmem:[#allocation5 + $0x150] sm:$0xff]
    %v89 = vld [vmem:[#allocation5 + $0x158] sm:$0xff]
    %v90 = vld [vmem:[#allocation5 + $0x160] sm:$0xff]
    %v91 = vld [vmem:[#allocation5 + $0x168] sm:$0xff]
    %v92 = vld [vmem:[#allocation5 + $0x170] sm:$0xff]
    %v93 = vld [vmem:[#allocation5 + $0x178] sm:$0xff]
    %v94 = vld [vmem:[#allocation5 + $0x180] sm:$0xff]
    %v95 = vld [vmem:[#allocation5 + $0x188] sm:$0xff]
    %v96 = vld [vmem:[#allocation5 + $0x190] sm:$0xff]
    %v97 = vld [vmem:[#allocation5 + $0x198] sm:$0xff]
    %v98 = vld [vmem:[#allocation5 + $0x1a0] sm:$0xff]
    %v99 = vld [vmem:[#allocation5 + $0x1a8] sm:$0xff]
    %v100 = vld [vmem:[#allocation5 + $0x1b0] sm:$0xff]
    %v101 = vld [vmem:[#allocation5 + $0x1b8] sm:$0xff]
    %v102 = vld [vmem:[#allocation5 + $0x1c0] sm:$0xff]
    %v103 = vld [vmem:[#allocation5 + $0x1c8] sm:$0xff]
    %v104 = vld [vmem:[#allocation5 + $0x1d0] sm:$0xff]
    %v105 = vld [vmem:[#allocation5 + $0x1d8] sm:$0xff]
    %v106 = vld [vmem:[#allocation5 + $0x1e0] sm:$0xff]
    %v107 = vld [vmem:[#allocation5 + $0x1e8] sm:$0xff]
    %v108 = vld [vmem:[#allocation5 + $0x1f0] sm:$0xff]
    %v109 = vld [vmem:[#allocation5 + $0x1f8] sm:$0xff]
    %v110 = vld [vmem:[#allocation5 + $0x200] sm:$0xff]
    %v111 = vld [vmem:[#allocation5 + $0x208] sm:$0xff]
    %v112 = vld [vmem:[#allocation5 + $0x210] sm:$0xff]
    %v113 = vld [vmem:[#allocation5 + $0x218] sm:$0xff]
    %v114 = vld [vmem:[#allocation5 + $0x220] sm:$0xff]
    %v115 = vld [vmem:[#allocation5 + $0x228] sm:$0xff]
    %v116 = vld [vmem:[#allocation5 + $0x230] sm:$0xff]
    %v117 = vld [vmem:[#allocation5 + $0x238] sm:$0xff]
    %v118 = vld [vmem:[%s2] sm:$0x1]
    %v120 = vlaneseq
    %v121 = vshrl.u32 %v120, 7
    %v122 = vsub.s32 0, %v121
    %v123 = vrot.slane %v118, %v122
    %vm125 = vcmask 523264
    %v127 = vsel %vm125, %v45, 0
    %129 = vmatprep.subr.mxu0 0.0
    %130 = vmatpush1.msra.mxu0 %v61
    %131 = vmatprep.subr.mxu0 0.0
    %132 = vmatpush1.msra.mxu0 %v60
    %133 = vmatprep.subr.mxu0 0.0
    %134 = vmatpush1.msra.mxu0 %v59
    %135 = vmatprep.subr.mxu0 0.0
    %136 = vmatpush1.msra.mxu0 %v58
    %137 = vmatprep.subr.mxu0 0.0
    %138 = vmatpush1.msra.mxu0 %v57
    %139 = vmatprep.subr.mxu0 0.0
    %140 = vmatpush1.msra.mxu0 %v56
    %141 = vmatprep.subr.mxu0 0.0
    %142 = vmatpush1.msra.mxu0 %v55
    %143 = vmatprep.subr.mxu0 0.0
    %144 = vmatpush1.msra.mxu0 %v54
    %145 = vmatprep.subr.mxu0 0.0
    %146 = vmatpush1.msra.mxu0 %v53
    %147 = vmatprep.subr.mxu0 0.0
    %148 = vmatpush1.msra.mxu0 %v52
    %149 = vmatprep.subr.mxu0 0.0
    %150 = vmatpush1.msra.mxu0 %v51
    %151 = vmatprep.subr.mxu0 0.0
    %152 = vmatpush1.msra.mxu0 %v50
    %153 = vmatprep.subr.mxu0 0.0
    %154 = vmatpush1.msra.mxu0 %v49
    %155 = vmatprep.subr.mxu0 0.0
    %156 = vmatpush1.msra.mxu0 %v48
    %157 = vmatprep.subr.mxu0 0.0
    %158 = vmatpush1.msra.mxu0 %v47
    %159 = vmatprep.subr.mxu0 0.0
    %160 = vmatpush1.msra.mxu0 %v46
    %161 = vmatprep.subr.mxu0 0.0
    %162 = vmatpush2.msra.mxu0 %v77
    %163 = vmatprep.subr.mxu0 0.0
    %164 = vmatpush2.msra.mxu0 %v76
    %165 = vmatprep.subr.mxu0 0.0
    %166 = vmatpush2.msra.mxu0 %v75
    %167 = vmatprep.subr.mxu0 0.0
    %168 = vmatpush2.msra.mxu0 %v74
    %169 = vmatprep.subr.mxu0 0.0
    %170 = vmatpush2.msra.mxu0 %v73
    %171 = vmatprep.subr.mxu0 0.0
    %172 = vmatpush2.msra.mxu0 %v72
    %173 = vmatprep.subr.mxu0 0.0
    %174 = vmatpush2.msra.mxu0 %v71
    %175 = vmatprep.subr.mxu0 0.0
    %176 = vmatpush2.msra.mxu0 %v70
    %177 = vmatprep.subr.mxu0 0.0
    %178 = vmatpush2.msra.mxu0 %v69
    %179 = vmatprep.subr.mxu0 0.0
    %180 = vmatpush2.msra.mxu0 %v68
    %181 = vmatprep.subr.mxu0 0.0
    %182 = vmatpush2.msra.mxu0 %v67
    %183 = vmatprep.subr.mxu0 0.0
    %184 = vmatpush2.msra.mxu0 %v66
    %185 = vmatprep.subr.mxu0 0.0
    %186 = vmatpush2.msra.mxu0 %v65
    %187 = vmatprep.subr.mxu0 0.0
    %188 = vmatpush2.msra.mxu0 %v64
    %189 = vmatprep.subr.mxu0 0.0
    %190 = vmatpush2.msra.mxu0 %v63
    %191 = vmatprep.subr.mxu0 0.0
    %192 = vmatpush2.msra.mxu0 %v62
    %193 = vmatprep.mubr.f32.mxu0 %v42
    %194 = vmatmul.mubr.f32.gmra.mxu0 %v41
    %v195 = vpop.f32.mrf.mxu0
    %v196 = vadd.f32 %v123, %v195
    %v197 = vpop.f32.mrf.mxu0
    %198 = vdwg.mxu0
    %199 = vmatprep.subr.mxu0 0.0
    %200 = vmatpush1.msra.mxu0 %v93
    %201 = vmatprep.subr.mxu0 0.0
    %202 = vmatpush1.msra.mxu0 %v92
    %203 = vmatprep.subr.mxu0 0.0
    %204 = vmatpush1.msra.mxu0 %v91
    %205 = vmatprep.subr.mxu0 0.0
    %206 = vmatpush1.msra.mxu0 %v90
    %207 = vmatprep.subr.mxu0 0.0
    %208 = vmatpush1.msra.mxu0 %v89
    %209 = vmatprep.subr.mxu0 0.0
    %210 = vmatpush1.msra.mxu0 %v88
    %211 = vmatprep.subr.mxu0 0.0
    %212 = vmatpush1.msra.mxu0 %v87
    %213 = vmatprep.subr.mxu0 0.0
    %214 = vmatpush1.msra.mxu0 %v86
    %215 = vmatprep.subr.mxu0 0.0
    %216 = vmatpush1.msra.mxu0 %v85
    %217 = vmatprep.subr.mxu0 0.0
    %218 = vmatpush1.msra.mxu0 %v84
    %219 = vmatprep.subr.mxu0 0.0
    %220 = vmatpush1.msra.mxu0 %v83
    %221 = vmatprep.subr.mxu0 0.0
    %222 = vmatpush1.msra.mxu0 %v82
    %223 = vmatprep.subr.mxu0 0.0
    %224 = vmatpush1.msra.mxu0 %v81
    %225 = vmatprep.subr.mxu0 0.0
    %226 = vmatpush1.msra.mxu0 %v80
    %227 = vmatprep.subr.mxu0 0.0
    %228 = vmatpush1.msra.mxu0 %v79
    %229 = vmatprep.subr.mxu0 0.0
    %230 = vmatpush1.msra.mxu0 %v78
    %231 = vmatprep.subr.mxu0 0.0
    %232 = vmatpush2.msra.mxu0 %v109
    %233 = vmatprep.subr.mxu0 0.0
    %234 = vmatpush2.msra.mxu0 %v108
    %235 = vmatprep.subr.mxu0 0.0
    %236 = vmatpush2.msra.mxu0 %v107
    %237 = vmatprep.subr.mxu0 0.0
    %238 = vmatpush2.msra.mxu0 %v106
    %239 = vmatprep.subr.mxu0 0.0
    %240 = vmatpush2.msra.mxu0 %v105
    %241 = vmatprep.subr.mxu0 0.0
    %242 = vmatpush2.msra.mxu0 %v104
    %243 = vmatprep.subr.mxu0 0.0
    %244 = vmatpush2.msra.mxu0 %v103
    %245 = vmatprep.subr.mxu0 0.0
    %246 = vmatpush2.msra.mxu0 %v102
    %247 = vmatprep.subr.mxu0 0.0
    %248 = vmatpush2.msra.mxu0 %v101
    %249 = vmatprep.subr.mxu0 0.0
    %250 = vmatpush2.msra.mxu0 %v100
    %251 = vmatprep.subr.mxu0 0.0
    %252 = vmatpush2.msra.mxu0 %v99
    %253 = vmatprep.subr.mxu0 0.0
    %254 = vmatpush2.msra.mxu0 %v98
    %255 = vmatprep.subr.mxu0 0.0
    %256 = vmatpush2.msra.mxu0 %v97
    %257 = vmatprep.subr.mxu0 0.0
    %258 = vmatpush2.msra.mxu0 %v96
    %259 = vmatprep.subr.mxu0 0.0
    %260 = vmatpush2.msra.mxu0 %v95
    %261 = vmatprep.subr.mxu0 0.0
    %262 = vmatpush2.msra.mxu0 %v94
    %263 = vmatprep.mubr.f32.mxu0 %v44
    %264 = vmatmul.mubr.f32.gmra.mxu0 %v43
    %v265 = vpop.f32.mrf.mxu0
    %v266 = vadd.f32 %v196, %v265
    %v267 = vpop.f32.mrf.mxu0
    %268 = vdwg.mxu0
    %269 = vmatprep.subr.mxu0 0.0
    %270 = vmatpush1.msra.mxu0 0.0
    %271 = vmatprep.subr.mxu0 0.0
    %272 = vmatpush1.msra.mxu0 0.0
    %273 = vmatprep.subr.mxu0 0.0
    %274 = vmatpush1.msra.mxu0 0.0
    %275 = vmatprep.subr.mxu0 0.0
    %276 = vmatpush1.msra.mxu0 0.0
    %277 = vmatprep.subr.mxu0 0.0
    %278 = vmatpush1.msra.mxu0 0.0
    %279 = vmatprep.subr.mxu0 0.0
    %280 = vmatpush1.msra.mxu0 0.0
    %281 = vmatprep.subr.mxu0 0.0
    %282 = vmatpush1.msra.mxu0 0.0
    %283 = vmatprep.subr.mxu0 0.0
    %284 = vmatpush1.msra.mxu0 0.0
    %285 = vmatprep.subr.mxu0 0.0
    %286 = vmatpush1.msra.mxu0 %v117
    %287 = vmatprep.subr.mxu0 0.0
    %288 = vmatpush1.msra.mxu0 %v116
    %289 = vmatprep.subr.mxu0 0.0
    %290 = vmatpush1.msra.mxu0 %v115
    %291 = vmatprep.subr.mxu0 0.0
    %292 = vmatpush1.msra.mxu0 %v114
    %293 = vmatprep.subr.mxu0 0.0
    %294 = vmatpush1.msra.mxu0 %v113
    %295 = vmatprep.subr.mxu0 0.0
    %296 = vmatpush1.msra.mxu0 %v112
    %297 = vmatprep.subr.mxu0 0.0
    %298 = vmatpush1.msra.mxu0 %v111
    %299 = vmatprep.subr.mxu0 0.0
    %300 = vmatpush1.msra.mxu0 %v110
    %301 = vmatprep.subr.mxu0 0.0
    %302 = vmatpush2.msra.mxu0 0.0
    %303 = vmatprep.subr.mxu0 0.0
    %304 = vmatpush2.msra.mxu0 0.0
    %305 = vmatprep.subr.mxu0 0.0
    %306 = vmatpush2.msra.mxu0 0.0
    %307 = vmatprep.subr.mxu0 0.0
    %308 = vmatpush2.msra.mxu0 0.0
    %309 = vmatprep.subr.mxu0 0.0
    %310 = vmatpush2.msra.mxu0 0.0
    %311 = vmatprep.subr.mxu0 0.0
    %312 = vmatpush2.msra.mxu0 0.0
    %313 = vmatprep.subr.mxu0 0.0
    %314 = vmatpush2.msra.mxu0 0.0
    %315 = vmatprep.subr.mxu0 0.0
    %316 = vmatpush2.msra.mxu0 0.0
    %317 = vmatprep.subr.mxu0 0.0
    %318 = vmatpush2.msra.mxu0 0.0
    %319 = vmatprep.subr.mxu0 0.0
    %320 = vmatpush2.msra.mxu0 0.0
    %321 = vmatprep.subr.mxu0 0.0
    %322 = vmatpush2.msra.mxu0 0.0
    %323 = vmatprep.subr.mxu0 0.0
    %324 = vmatpush2.msra.mxu0 0.0
    %325 = vmatprep.subr.mxu0 0.0
    %326 = vmatpush2.msra.mxu0 0.0
    %327 = vmatprep.subr.mxu0 0.0
    %328 = vmatpush2.msra.mxu0 0.0
    %329 = vmatprep.subr.mxu0 0.0
    %330 = vmatpush2.msra.mxu0 0.0
    %331 = vmatprep.subr.mxu0 0.0
    %332 = vmatpush2.msra.mxu0 0.0
    %333 = vmatprep.mubr.f32.mxu0 0.0
    %334 = vmatmul.mubr.f32.gmra.mxu0 %v127
    %v335 = vpop.f32.mrf.mxu0
    %v336 = vadd.f32 %v266, %v335
    %v337 = vpop.f32.mrf.mxu0
    %338 = vdwg.mxu0
    %vm339 = vcmask 982016
    %340 = vst.msk [vmem:[#allocation7] sm:$0xff] %vm339, %v336
    // Predicated region
    $region22: #{net_forward.1} parent=1 // pred_check
      _
    $region23: #{net_forward.1} parent=1 // pred_check_branch
      %342 = sbr.rel (0) target = $region25
    $region24: #{net_forward.1} parent=1 // pred_region
      %s344 = ssub.s32 128, 128
      %345 = vsyncadd [#allocation4], %s344
      %s347 = sshll.u32 [#allocation7], 4
      %s348 = int_to_ptr.vmem [resolvable:$true] %s347
      %350 = dma.vmem_to_hbm [thread:$0]  %s348, 128, %s3, [#allocation4]
    $region25: #{net_forward.1} parent=1 // pred_fallthru
      _
    // Predicated region
    $region26: #{net_forward.1} parent=1 // pred_check
      _
    $region27: #{net_forward.1} parent=1 // pred_check_branch
      %352 = sbr.rel (0) target = $region29
    $region28: #{net_forward.1} parent=1 // pred_region
      %353 = dma.done [#allocation4], 128
    $region29: #{net_forward.1} parent=1 // pred_fallthru
      _
    %354 = vsyncpa [#allocation3], 1
    %355 = vsyncpa [#allocation6], 1
    %356 = vsyncpa [#allocation4], 1

</llo_original>
